<compile_context>
chip_gen: v7x
topology: tpu7x:2x2x1
jax: 0.10.0
libtpu: 0.0.40
codegen_flags: <defaults>
</compile_context>

<pallas_src>
import math

import jax
import jax.numpy as jnp
from jax import lax
from jax.experimental import pallas as pl
from jax.experimental.pallas import tpu as pltpu


def _disc_e_kernel(u_ref, hpl_ref, hmi_ref, b_ref, out_ref):
    # u_ref  : (1, 1, n_h)   per-batch u = s @ W^T (same dtype as h), resident per b
    # hpl_ref: (1, TN, n_h)  positive node embeddings tile (native dtype)
    # hmi_ref: (1, TN, n_h)  negative node embeddings tile (native dtype)
    # b_ref  : (1,)          bias scalar in SMEM (f32)
    # out_ref: (1, 2, TN)    [sc1_tile ; sc2_tile], lane-dense along TN, f32
    f32 = jnp.float32
    dn = (((1,), (1,)), ((), ()))          # contract n_h of both operands (A @ B^T)

    u = u_ref[0]                           # (1, n_h), native h dtype
    bias = b_ref[0]

    sc1 = lax.dot_general(u, hpl_ref[0], dn, preferred_element_type=f32)  # (1, TN)
    sc2 = lax.dot_general(u, hmi_ref[0], dn, preferred_element_type=f32)  # (1, TN)

    out_ref[0, 0:1, :] = sc1 + bias
    out_ref[0, 1:2, :] = sc2 + bias


def discriminator_e_forward(s, h_pl, h_mi, weight, bias,
                            s_bias1=None, s_bias2=None, *, block_rows=None):
    """s: (B, n_h); h_pl/h_mi: (B, N, n_h); weight: (1, n_h, n_h); bias: (1,)."""
    B, N, n_h = h_pl.shape
    assert s.shape == (B, n_h)
    assert h_mi.shape == (B, N, n_h)

    itemsize = jnp.dtype(h_pl.dtype).itemsize

    # Node-dim tile: target ~2 MiB per h stream per grid step (4 MiB streamed),
    # lane-aligned.  If the whole node axis fits in one target-sized tile, take
    # it in one block (no (8,128) issue: block dims then equal the full dims).
    if block_rows is None:
        target_rows = max(128, (2 << 20) // (n_h * itemsize))
    else:
        target_rows = max(1, block_rows)
    if target_rows >= N:
        tn = N
    else:
        tn = max(128, (target_rows // 128) * 128)
    num_tiles = pl.cdiv(N, tn)
    grid = (B, num_tiles)

    # Hoist the tiny per-batch projection u = s @ W[0]^T out of the kernel.
    u = jnp.einsum("bj,ij->bi", s.astype(jnp.float32),
                   weight[0].astype(jnp.float32))               # (B, n_h)
    u3 = u.astype(h_pl.dtype).reshape(B, 1, n_h)                # match stream dtype
    b1 = bias.reshape(1).astype(jnp.float32)

    cost = pl.CostEstimate(
        flops=int(4 * B * N * n_h),
        transcendentals=0,
        bytes_accessed=int(2 * B * N * n_h * itemsize           # h_pl + h_mi streams
                           + B * n_h * itemsize                  # u
                           + B * 2 * N * 4),                     # output scores
    )

    out = pl.pallas_call(
        _disc_e_kernel,
        out_shape=jax.ShapeDtypeStruct((B, 2, N), jnp.float32),
        grid_spec=pltpu.PrefetchScalarGridSpec(
            num_scalar_prefetch=0,
            grid=grid,
            in_specs=[
                pl.BlockSpec((1, 1, n_h), lambda b, n: (b, 0, 0)),    # u (resident per b)
                pl.BlockSpec((1, tn, n_h), lambda b, n: (b, n, 0)),   # h_pl stream
                pl.BlockSpec((1, tn, n_h), lambda b, n: (b, n, 0)),   # h_mi stream
                pl.BlockSpec(memory_space=pltpu.MemorySpace.SMEM),    # bias scalar
            ],
            out_specs=pl.BlockSpec((1, 2, tn), lambda b, n: (b, 0, n)),
        ),
        compiler_params=pltpu.CompilerParams(
            dimension_semantics=("parallel", "parallel"),
            vmem_limit_bytes=32 * 1024 * 1024,
        ),
        cost_estimate=cost,
    )(u3, h_pl, h_mi, b1)

    if s_bias1 is None and s_bias2 is None:
        # (B, 2, N) -> (B, 2N) reproduces torch.cat((sc_1, sc_2), dim=1).
        return out.reshape(B, 2 * N)

    sc1 = out[:, 0, :]
    sc2 = out[:, 1, :]
    if s_bias1 is not None:
        sc1 = sc1 + s_bias1
    if s_bias2 is not None:
        sc2 = sc2 + s_bias2
    return jnp.concatenate([sc1, sc2], axis=1)


def init_bilinear_params(key, n_h):
    """xavier_uniform_ for a (1, n_h, n_h) nn.Bilinear weight; bias filled with 0."""
    fan_in = n_h * n_h   # in1_features * receptive_field (= size(1) * size(2))
    fan_out = 1 * n_h    # out_features * receptive_field
    bound = math.sqrt(6.0 / float(fan_in + fan_out))
    weight = jax.random.uniform(key, (1, n_h, n_h), jnp.float32, -bound, bound)
    bias = jnp.zeros((1,), jnp.float32)
    return weight, bias


if __name__ == "__main__":
    # Small shapes consistent with the module; N=300 exercises the single-tile
    # path by default and, with block_rows=128, a multi-tile grid with a
    # partial (clipped) last block — no wrapper-side padding in either case.
    B, N, n_h = 2, 300, 32

    key = jax.random.PRNGKey(0)
    kw, ks, kp, km = jax.random.split(key, 4)

    weight, bias = init_bilinear_params(kw, n_h)
    s = jax.random.normal(ks, (B, n_h), jnp.float32)
    h_pl = jax.random.normal(kp, (B, N, n_h), jnp.float32)
    h_mi = jax.random.normal(km, (B, N, n_h), jnp.float32)

    # Pure-JAX reference of the bilinear form (Discriminator_E semantics).
    ref_sc1 = jnp.einsum("bni,ij,bj->bn", h_pl, weight[0], s) + bias[0]
    ref_sc2 = jnp.einsum("bni,ij,bj->bn", h_mi, weight[0], s) + bias[0]
    ref = jnp.concatenate([ref_sc1, ref_sc2], axis=1)

    # Default (auto tile: whole node axis in one block).
    logits = discriminator_e_forward(s, h_pl, h_mi, weight, bias)
    jax.block_until_ready(logits)
    assert logits.shape == (B, 2 * N)
    assert jnp.allclose(logits, ref, atol=1e-4, rtol=1e-4), \
        float(jnp.max(jnp.abs(logits - ref)))

    # Forced small tile: multi-tile grid (B, 3) with a clipped partial last block.
    logits_t = discriminator_e_forward(s, h_pl, h_mi, weight, bias, block_rows=128)
    jax.block_until_ready(logits_t)
    assert jnp.allclose(logits_t, ref, atol=1e-4, rtol=1e-4), \
        float(jnp.max(jnp.abs(logits_t - ref)))

    print("KERNEL_OK")
</pallas_src>

<mosaic_0001>
module attributes {stable_mosaic.version = 11 : i64} {
  func.func @_disc_e_kernel(%arg0: i32, %arg1: i32, %arg2: memref<1x1x32xf32, #tpu.memory_space<vmem>>, %arg3: memref<1x300x32xf32, #tpu.memory_space<vmem>>, %arg4: memref<1x300x32xf32, #tpu.memory_space<vmem>>, %arg5: memref<1xf32, #tpu.memory_space<smem>>, %arg6: memref<1x2x300xf32, #tpu.memory_space<vmem>>) attributes {dimension_semantics = [#tpu.dimension_semantics<parallel>, #tpu.dimension_semantics<parallel>], iteration_bounds = array<i64: 2, 1>, scalar_prefetch = 0 : i64, scratch_operands = 0 : i64, tpu.core_type = #tpu.core_type<tc>, window_params = [{transform_indices = @transform_0, window_bounds = array<i64: 1, 1, 32>}, {transform_indices = @transform_1, window_bounds = array<i64: 1, 300, 32>}, {transform_indices = @transform_2, window_bounds = array<i64: 1, 300, 32>}, {transform_indices = @transform_3, window_bounds = array<i64: 1>}, {transform_indices = @transform_4, window_bounds = array<i64: 1, 2, 300>}]} {
    %c0 = arith.constant 0 : index
    %c0_0 = arith.constant 0 : index
    %c0_1 = arith.constant 0 : index
    %0 = vector.load %arg2[%c0, %c0_0, %c0_1] : memref<1x1x32xf32, #tpu.memory_space<vmem>>, vector<1x1x32xf32>
    %1 = vector.shape_cast %0 : vector<1x1x32xf32> to vector<1x32xf32>
    %c0_2 = arith.constant 0 : index
    %2 = memref.load %arg5[%c0_2] : memref<1xf32, #tpu.memory_space<smem>>
    %c0_3 = arith.constant 0 : index
    %c0_4 = arith.constant 0 : index
    %c0_5 = arith.constant 0 : index
    %3 = vector.load %arg3[%c0_3, %c0_4, %c0_5] : memref<1x300x32xf32, #tpu.memory_space<vmem>>, vector<1x300x32xf32>
    %4 = vector.shape_cast %3 : vector<1x300x32xf32> to vector<300x32xf32>
    %cst = arith.constant dense<0.000000e+00> : vector<1x300xf32>
    %5 = tpu.matmul %1, %4, %cst {dimension_numbers = #tpu.dot_dimension_numbers<[1], [1], [0], [0], [0, 0, 1, 0], [], []>} : vector<1x32xf32>, vector<300x32xf32>, vector<1x300xf32> -> vector<1x300xf32>
    %c0_6 = arith.constant 0 : index
    %c0_7 = arith.constant 0 : index
    %c0_8 = arith.constant 0 : index
    %6 = vector.load %arg4[%c0_6, %c0_7, %c0_8] : memref<1x300x32xf32, #tpu.memory_space<vmem>>, vector<1x300x32xf32>
    %7 = vector.shape_cast %6 : vector<1x300x32xf32> to vector<300x32xf32>
    %cst_9 = arith.constant dense<0.000000e+00> : vector<1x300xf32>
    %8 = tpu.matmul %1, %7, %cst_9 {dimension_numbers = #tpu.dot_dimension_numbers<[1], [1], [0], [0], [0, 0, 1, 0], [], []>} : vector<1x32xf32>, vector<300x32xf32>, vector<1x300xf32> -> vector<1x300xf32>
    %9 = vector.broadcast %2 : f32 to vector<1x300xf32>
    %10 = arith.addf %5, %9 : vector<1x300xf32>
    %c0_10 = arith.constant 0 : index
    %c0_11 = arith.constant 0 : index
    %c0_12 = arith.constant 0 : index
    %11 = vector.load %arg6[%c0_10, %c0_11, %c0_12] : memref<1x2x300xf32, #tpu.memory_space<vmem>>, vector<1x1x300xf32>
    %12 = vector.shape_cast %11 : vector<1x1x300xf32> to vector<1x300xf32>
    %13 = vector.shape_cast %10 : vector<1x300xf32> to vector<1x1x300xf32>
    tpu.vector_store %arg6[%c0_10, %c0_11, %c0_12], %13 {strides = array<i32>} : memref<1x2x300xf32, #tpu.memory_space<vmem>>, vector<1x1x300xf32>,
    %14 = vector.broadcast %2 : f32 to vector<1x300xf32>
    %15 = arith.addf %8, %14 : vector<1x300xf32>
    %c0_13 = arith.constant 0 : index
    %c1 = arith.constant 1 : index
    %c0_14 = arith.constant 0 : index
    %16 = vector.load %arg6[%c0_13, %c1, %c0_14] : memref<1x2x300xf32, #tpu.memory_space<vmem>>, vector<1x1x300xf32>
    %17 = vector.shape_cast %16 : vector<1x1x300xf32> to vector<1x300xf32>
    %18 = vector.shape_cast %15 : vector<1x300xf32> to vector<1x1x300xf32>
    tpu.vector_store %arg6[%c0_13, %c1, %c0_14], %18 {strides = array<i32>} : memref<1x2x300xf32, #tpu.memory_space<vmem>>, vector<1x1x300xf32>,
    return
  }
  func.func @transform_0(%arg0: i32, %arg1: i32) -> (i32, i32, i32) {
    %c0_i32 = arith.constant 0 : i32
    %c0_i32_0 = arith.constant 0 : i32
    %c0_i32_1 = arith.constant 0 : i32
    return %arg0, %c0_i32, %c0_i32_0 : i32, i32, i32
  }
  func.func @transform_1(%arg0: i32, %arg1: i32) -> (i32, i32, i32) {
    %c0_i32 = arith.constant 0 : i32
    %c0_i32_0 = arith.constant 0 : i32
    return %arg0, %arg1, %c0_i32 : i32, i32, i32
  }
  func.func @transform_2(%arg0: i32, %arg1: i32) -> (i32, i32, i32) {
    %c0_i32 = arith.constant 0 : i32
    %c0_i32_0 = arith.constant 0 : i32
    return %arg0, %arg1, %c0_i32 : i32, i32, i32
  }
  func.func @transform_3(%arg0: i32, %arg1: i32) -> i32 {
    %c0_i32 = arith.constant 0 : i32
    %c0_i32_0 = arith.constant 0 : i32
    return %c0_i32 : i32
  }
  func.func @transform_4(%arg0: i32, %arg1: i32) -> (i32, i32, i32) {
    %c0_i32 = arith.constant 0 : i32
    %c0_i32_0 = arith.constant 0 : i32
    return %arg0, %c0_i32, %arg1 : i32, i32, i32
  }
}

</mosaic_0001>

<llo_original>
// kernel: tpu_custom_call.1
$region0: #{tpu_custom_call.1}
  #allocation0 [shape = 'u32[]', space=smem, size = 0x4, offset = 0x4, fixed_abs, tag = 'smem constant byte address 0x4 - core index']
  #allocation1 [shape = 'u32[144,128]{1,0:T(1,128)}', space=vmem, size = 0x12000, scoped, tag = 'internal scratch']
  #allocation2 [shape = 'f32[1]{0:T(128)S(6)}', space=smem, size = 0x200, scoped, tag = 'scoped memory for tpu_custom_call.1']
  %s0 = inlined_call_operand.vmem [shape: f32[2,1,32], index: 0, kind: input, shape index: {}]
  %s1 = inlined_call_operand.vmem [shape: f32[2,300,32], index: 1, kind: input, shape index: {}]
  %s2 = inlined_call_operand.vmem [shape: f32[2,300,32], index: 2, kind: input, shape index: {}]
  %s3 = inlined_call_operand.<no memory space> [shape: f32[1], index: 3, kind: input, shape index: {}]
  %s4 = inlined_call_operand.hbm [shape: f32[2,2,300], index: 4, kind: output, shape index: {}]
  %s5 = sld [smem:[#allocation0]]
  $region49: #{tpu_custom_call.1} parent=0
    _
  %s7 = ssub.s32 1, %s5
  %s8 = scalar_select 0, %s7, %s5
  %9 = sst [smem:[#allocation2]] %s3
  $region1: #{tpu_custom_call.1} parent=0
    #allocation3 [shape = 'u8[6144]{0}', space=vmem, size = 0x1800, scoped, tag = 'output window, operand 0']
    #allocation4 [shape = 's32[2]{0}', space=sflag, size = 0x8, scoped, tag = 'scoped memory for tpu_custom_call.1']
    %10 = vsyncpa [#allocation4], 0
    %s11 = scalar_lea.sflag [#allocation4], 1
    %12 = vsyncpa %s11, 0
    loop: start=0, step=1, limit=4
    $region2: #{tpu_custom_call.1} parent=1 // loop_pre_header
      _
    $region3: #{tpu_custom_call.1} parent=1 // loop_header
      %s14 = sphi 0, %s18
      %p15 = scmp.ge.s32.totalorder %s14, 4
      %s21 = sphi 0, %s33
      %s22 = sphi 0, %s29
      %s23 = sphi 0, %s21
      %s24 = sphi 0, %s22
      %s25 = sphi 0, %s23
      %s26 = sphi 0, %s24
      %s36 = sphi 0, %s38
      %s39 = sphi 0, %s36
      %s40 = sphi 0, %s39
      %s56 = sphi 0, %s40
      %s64 = sphi 0, %s66
      %s67 = sphi 0, %s64
      %s68 = sphi 0, %s67
      %s84 = sphi 0, %s68
      %s92 = sphi 0, %s94
      %s95 = sphi 0, %s92
      %s96 = sphi 0, %s95
      %s112 = sphi 0, %s96
      %s116 = sphi 0, %s116
      %s118 = sphi 0, %s116
      %s119 = sphi 0, %s118
      %s133 = sphi 0, %s119
      %s141 = sphi 0, %s143
      %s144 = sphi 0, %s141
      %s145 = sphi 0, %s144
      %s161 = sphi 0, %s145
    $region4: #{tpu_custom_call.1} parent=1 // loop_header_branch
      %17 = sbr.rel (%p15) target = $region8
    $region5: #{tpu_custom_call.1} parent=1 // loop_body
      %s19 = ssub.s32 %s14, 1
      %s20 = ssub.s32 %s14, 2
      %s27 = sadd.s32 1, %s22
      %p28 = scmp.ge.s32.totalorder %s27, 1
      %s29 = scalar_select %p28, 0, %s27
      %s30 = sadd.s32 1, %s21
      %s31 = scalar_select %p28, %s30, %s21
      %p32 = scmp.ge.s32.totalorder %s31, 2
      %s33 = scalar_select %p32, 0, %s31
      %s34 = ssub.s32 %s21, %s33
      %p35 = scmp.eq.s32.totalorder %s34, 0
      %s37 = sadd.s32 %s36, 1
      %s38 = scalar_select %p35, %s36, %s37
      %p41 = pneg %p35
      %p42 = scmp.eq.s32.totalorder %s14, 1
      %p43 = por %p41, %p42
      %p44 = scmp.ne.s32.totalorder %s36, %s39
      %p45 = scmp.eq.s32.totalorder %s14, 0
      %p46 = por %p44, %p45
      %p47 = scmp.ne.s32.totalorder %s36, %s39
      %p48 = scmp.eq.s32.totalorder %s19, 1
      %p49 = por %p47, %p48
      %p50 = scmp.ne.s32.totalorder %s39, %s40
      %p51 = scmp.eq.s32.totalorder %s19, 0
      %p52 = por %p50, %p51
      %p53 = scmp.ne.s32.totalorder %s39, %s40
      %p54 = scmp.eq.s32.totalorder %s20, 1
      %p55 = por %p53, %p54
      %p57 = scmp.ne.s32.totalorder %s40, %s56
      %p58 = scmp.eq.s32.totalorder %s20, 0
      %p59 = por %p57, %p58
      %s60 = ssub.s32 %s21, %s33
      %s61 = ssub.s32 %s22, %s29
      %s62 = sor.u32 %s60, %s61
      %p63 = scmp.eq.s32.totalorder %s62, 0
      %s65 = sadd.s32 %s64, 1
      %s66 = scalar_select %p63, %s64, %s65
      %p69 = pneg %p63
      %p70 = scmp.eq.s32.totalorder %s14, 1
      %p71 = por %p69, %p70
      %p72 = scmp.ne.s32.totalorder %s64, %s67
      %p73 = scmp.eq.s32.totalorder %s14, 0
      %p74 = por %p72, %p73
      %p75 = scmp.ne.s32.totalorder %s64, %s67
      %p76 = scmp.eq.s32.totalorder %s19, 1
      %p77 = por %p75, %p76
      %p78 = scmp.ne.s32.totalorder %s67, %s68
      %p79 = scmp.eq.s32.totalorder %s19, 0
      %p80 = por %p78, %p79
      %p81 = scmp.ne.s32.totalorder %s67, %s68
      %p82 = scmp.eq.s32.totalorder %s20, 1
      %p83 = por %p81, %p82
      %p85 = scmp.ne.s32.totalorder %s68, %s84
      %p86 = scmp.eq.s32.totalorder %s20, 0
      %p87 = por %p85, %p86
      %s88 = ssub.s32 %s21, %s33
      %s89 = ssub.s32 %s22, %s29
      %s90 = sor.u32 %s88, %s89
      %p91 = scmp.eq.s32.totalorder %s90, 0
      %s93 = sadd.s32 %s92, 1
      %s94 = scalar_select %p91, %s92, %s93
      %p97 = pneg %p91
      %p98 = scmp.eq.s32.totalorder %s14, 1
      %p99 = por %p97, %p98
      %p100 = scmp.ne.s32.totalorder %s92, %s95
      %p101 = scmp.eq.s32.totalorder %s14, 0
      %p102 = por %p100, %p101
      %p103 = scmp.ne.s32.totalorder %s92, %s95
      %p104 = scmp.eq.s32.totalorder %s19, 1
      %p105 = por %p103, %p104
      %p106 = scmp.ne.s32.totalorder %s95, %s96
      %p107 = scmp.eq.s32.totalorder %s19, 0
      %p108 = por %p106, %p107
      %p109 = scmp.ne.s32.totalorder %s95, %s96
      %p110 = scmp.eq.s32.totalorder %s20, 1
      %p111 = por %p109, %p110
      %p113 = scmp.ne.s32.totalorder %s96, %s112
      %p114 = scmp.eq.s32.totalorder %s20, 0
      %p115 = por %p113, %p114
      %s117 = sadd.s32 %s116, 1
      %p120 = scmp.eq.s32.totalorder %s14, 1
      %p121 = scmp.ne.s32.totalorder %s116, %s118
      %p122 = scmp.eq.s32.totalorder %s14, 0
      %p123 = por %p121, %p122
      %p124 = scmp.ne.s32.totalorder %s116, %s118
      %p125 = scmp.eq.s32.totalorder %s19, 1
      %p126 = por %p124, %p125
      %p127 = scmp.ne.s32.totalorder %s118, %s119
      %p128 = scmp.eq.s32.totalorder %s19, 0
      %p129 = por %p127, %p128
      %p130 = scmp.ne.s32.totalorder %s118, %s119
      %p131 = scmp.eq.s32.totalorder %s20, 1
      %p132 = por %p130, %p131
      %p134 = scmp.ne.s32.totalorder %s119, %s133
      %p135 = scmp.eq.s32.totalorder %s20, 0
      %p136 = por %p134, %p135
      %s137 = ssub.s32 %s21, %s33
      %s138 = ssub.s32 %s22, %s29
      %s139 = sor.u32 %s137, %s138
      %p140 = scmp.eq.s32.totalorder %s139, 0
      %s142 = sadd.s32 %s141, 1
      %s143 = scalar_select %p140, %s141, %s142
      %p146 = pneg %p140
      %p147 = scmp.eq.s32.totalorder %s14, 1
      %p148 = por %p146, %p147
      %p149 = scmp.ne.s32.totalorder %s141, %s144
      %p150 = scmp.eq.s32.totalorder %s14, 0
      %p151 = por %p149, %p150
      %p152 = scmp.ne.s32.totalorder %s141, %s144
      %p153 = scmp.eq.s32.totalorder %s19, 1
      %p154 = por %p152, %p153
      %p155 = scmp.ne.s32.totalorder %s144, %s145
      %p156 = scmp.eq.s32.totalorder %s19, 0
      %p157 = por %p155, %p156
      %p158 = scmp.ne.s32.totalorder %s144, %s145
      %p159 = scmp.eq.s32.totalorder %s20, 1
      %p160 = por %p158, %p159
      %p162 = scmp.ne.s32.totalorder %s145, %s161
      %p163 = scmp.eq.s32.totalorder %s20, 0
      %p164 = por %p162, %p163
      %p165 = scmp.le.s32.totalorder 1, %s14
      %p166 = scmp.lt.s32.totalorder %s14, 3
      %p167 = pnand %p165, %p166
      %p168 = pneg %p167
      // Predicated region
      $region9: #{tpu_custom_call.1} parent=5 // pred_check
        _
      $region10: #{tpu_custom_call.1} parent=5 // pred_check_branch
        %170 = sbr.rel (%p167) target = $region12
      $region11: #{tpu_custom_call.1} parent=5 // pred_region
        %s171 = ssub.s32 %s14, 1
        // Predicated region
        $region13: #{tpu_custom_call.1} parent=11 // pred_check
          %p172 = pneg %p129
        $region14: #{tpu_custom_call.1} parent=11 // pred_check_branch
          %174 = sbr.rel (%p172) target = $region16
        $region15: #{tpu_custom_call.1} parent=11 // pred_region
          _
        $region16: #{tpu_custom_call.1} parent=11 // pred_fallthru
          _
      $region12: #{tpu_custom_call.1} parent=5 // pred_fallthru
        _
      %p175 = scmp.lt.s32.totalorder %s14, 2
      // Predicated region
      $region17: #{tpu_custom_call.1} parent=5 // pred_check
        %p176 = pneg %p175
      $region18: #{tpu_custom_call.1} parent=5 // pred_check_branch
        %178 = sbr.rel (%p176) target = $region20
      $region19: #{tpu_custom_call.1} parent=5 // pred_region
        // Predicated region
        $region21: #{tpu_custom_call.1} parent=19 // pred_check
          %p179 = pneg %p46
        $region22: #{tpu_custom_call.1} parent=19 // pred_check_branch
          %181 = sbr.rel (%p179) target = $region24
        $region23: #{tpu_custom_call.1} parent=19 // pred_region
          %p182 = scmp.lt.s32.totalorder %s21, 1
          %s183 = scalar_select %p182, %s21, 1
          %s184 = scalar_lea.vmem %s0, %s183
        $region24: #{tpu_custom_call.1} parent=19 // pred_fallthru
          _
        // Predicated region
        $region25: #{tpu_custom_call.1} parent=19 // pred_check
          %p185 = pneg %p74
        $region26: #{tpu_custom_call.1} parent=19 // pred_check_branch
          %187 = sbr.rel (%p185) target = $region28
        $region27: #{tpu_custom_call.1} parent=19 // pred_region
          %s188 = smul.u32 38, %s22
          %p189 = scmp.lt.s32.totalorder %s21, 1
          %s190 = scalar_select %p189, %s21, 1
          %p191 = scmp.lt.s32.totalorder %s188, 37
          %s192 = scalar_select %p191, %s188, 37
          %s193 = smul.addr %s190, 38
          %s194 = sadd.s32 %s192, %s193
          %s195 = smul.addr %s194, 8
          %s196 = scalar_lea.vmem %s1, %s195
          %s197 = smul.u32 38, %s22
        $region28: #{tpu_custom_call.1} parent=19 // pred_fallthru
          _
        // Predicated region
        $region29: #{tpu_custom_call.1} parent=19 // pred_check
          %p198 = pneg %p102
        $region30: #{tpu_custom_call.1} parent=19 // pred_check_branch
          %200 = sbr.rel (%p198) target = $region32
        $region31: #{tpu_custom_call.1} parent=19 // pred_region
          %s201 = smul.u32 38, %s22
          %p202 = scmp.lt.s32.totalorder %s21, 1
          %s203 = scalar_select %p202, %s21, 1
          %p204 = scmp.lt.s32.totalorder %s201, 37
          %s205 = scalar_select %p204, %s201, 37
          %s206 = smul.addr %s203, 38
          %s207 = sadd.s32 %s205, %s206
          %s208 = smul.addr %s207, 8
          %s209 = scalar_lea.vmem %s2, %s208
          %s210 = smul.u32 38, %s22
        $region32: #{tpu_custom_call.1} parent=19 // pred_fallthru
          _
      $region20: #{tpu_custom_call.1} parent=5 // pred_fallthru
        _
      %p211 = scmp.le.s32.totalorder 1, %s14
      %p212 = scmp.lt.s32.totalorder %s14, 3
      %p213 = pnand %p211, %p212
      %p214 = pneg %p213
      // Predicated region
      $region33: #{tpu_custom_call.1} parent=5 // pred_check
        _
      $region34: #{tpu_custom_call.1} parent=5 // pred_check_branch
        %216 = sbr.rel (%p213) target = $region36
      $region35: #{tpu_custom_call.1} parent=5 // pred_region
        %s217 = ssub.s32 %s14, 1
        %p218 = scmp.lt.s32.totalorder %s23, 1
        %s219 = scalar_select %p218, %s23, 1
        %s220 = scalar_lea.vmem %s0, %s219
        %p221 = pneg %p52
        %p222 = pneg %p49
        %s223 = smul.u32 38, %s24
        %p224 = scmp.lt.s32.totalorder %s23, 1
        %s225 = scalar_select %p224, %s23, 1
        %p226 = scmp.lt.s32.totalorder %s223, 37
        %s227 = scalar_select %p226, %s223, 37
        %s228 = smul.addr %s225, 38
        %s229 = sadd.s32 %s227, %s228
        %s230 = smul.addr %s229, 8
        %s231 = scalar_lea.vmem %s1, %s230
        %p232 = pneg %p80
        %p233 = pneg %p77
        %s234 = smul.u32 38, %s24
        %p235 = scmp.lt.s32.totalorder %s23, 1
        %s236 = scalar_select %p235, %s23, 1
        %p237 = scmp.lt.s32.totalorder %s234, 37
        %s238 = scalar_select %p237, %s234, 37
        %s239 = smul.addr %s236, 38
        %s240 = sadd.s32 %s238, %s239
        %s241 = smul.addr %s240, 8
        %s242 = scalar_lea.vmem %s2, %s241
        %p243 = pneg %p108
        %p244 = pneg %p105
        %p245 = pneg %p129
        %p246 = pneg %p126
        %p247 = pneg %p157
        %p248 = pneg %p154
        %s249 = sand.u32 %s144, 1
        %s250 = scalar_lea.sflag [#allocation4], %s249
        %s251 = sand.u32 %s144, 1
        %s252 = smul.addr %s251, 6
        %s253 = scalar_lea.vmem [#allocation3], %s252
        %p254 = scmp.lt.s32.totalorder %s23, 1
        %s255 = scalar_select %p254, %s23, 1
        %s256 = scalar_lea.vmem %s0, %s255
        %s257 = smul.u32 38, %s24
        %p258 = scmp.lt.s32.totalorder %s23, 1
        %s259 = scalar_select %p258, %s23, 1
        %p260 = scmp.lt.s32.totalorder %s257, 37
        %s261 = scalar_select %p260, %s257, 37
        %s262 = smul.addr %s259, 38
        %s263 = sadd.s32 %s261, %s262
        %s264 = smul.addr %s263, 8
        %s265 = scalar_lea.vmem %s1, %s264
        %s266 = smul.u32 38, %s24
        %s267 = smul.u32 38, %s24
        %p268 = scmp.lt.s32.totalorder %s23, 1
        %s269 = scalar_select %p268, %s23, 1
        %p270 = scmp.lt.s32.totalorder %s267, 37
        %s271 = scalar_select %p270, %s267, 37
        %s272 = smul.addr %s269, 38
        %s273 = sadd.s32 %s271, %s272
        %s274 = smul.addr %s273, 8
        %s275 = scalar_lea.vmem %s2, %s274
        %s276 = smul.u32 38, %s24
        %s277 = smul.u32 3, %s24
        %v278 = vld [vmem:[%s256] sm:$0x1]
        %s279 = sld [smem:[#allocation2]]
        %v280 = vld [vmem:[%s265] sm:$0xff]
        %v281 = vld [vmem:[%s265 + $0x8] sm:$0xff]
        %v282 = vld [vmem:[%s265 + $0x10] sm:$0xff]
        %v283 = vld [vmem:[%s265 + $0x18] sm:$0xff]
        %v284 = vld [vmem:[%s265 + $0x20] sm:$0xff]
        %v285 = vld [vmem:[%s265 + $0x28] sm:$0xff]
        %v286 = vld [vmem:[%s265 + $0x30] sm:$0xff]
        %v287 = vld [vmem:[%s265 + $0x38] sm:$0xff]
        %v288 = vld [vmem:[%s265 + $0x40] sm:$0xff]
        %v289 = vld [vmem:[%s265 + $0x48] sm:$0xff]
        %v290 = vld [vmem:[%s265 + $0x50] sm:$0xff]
        %v291 = vld [vmem:[%s265 + $0x58] sm:$0xff]
        %v292 = vld [vmem:[%s265 + $0x60] sm:$0xff]
        %v293 = vld [vmem:[%s265 + $0x68] sm:$0xff]
        %v294 = vld [vmem:[%s265 + $0x70] sm:$0xff]
        %v295 = vld [vmem:[%s265 + $0x78] sm:$0xff]
        %v296 = vld [vmem:[%s265 + $0x80] sm:$0xff]
        %v297 = vld [vmem:[%s265 + $0x88] sm:$0xff]
        %v298 = vld [vmem:[%s265 + $0x90] sm:$0xff]
        %v299 = vld [vmem:[%s265 + $0x98] sm:$0xff]
        %v300 = vld [vmem:[%s265 + $0xa0] sm:$0xff]
        %v301 = vld [vmem:[%s265 + $0xa8] sm:$0xff]
        %v302 = vld [vmem:[%s265 + $0xb0] sm:$0xff]
        %v303 = vld [vmem:[%s265 + $0xb8] sm:$0xff]
        %v304 = vld [vmem:[%s265 + $0xc0] sm:$0xff]
        %v305 = vld [vmem:[%s265 + $0xc8] sm:$0xff]
        %v306 = vld [vmem:[%s265 + $0xd0] sm:$0xff]
        %v307 = vld [vmem:[%s265 + $0xd8] sm:$0xff]
        %v308 = vld [vmem:[%s265 + $0xe0] sm:$0xff]
        %v309 = vld [vmem:[%s265 + $0xe8] sm:$0xff]
        %v310 = vld [vmem:[%s265 + $0xf0] sm:$0xff]
        %v311 = vld [vmem:[%s265 + $0xf8] sm:$0xff]
        %v312 = vld [vmem:[%s265 + $0x100] sm:$0xff]
        %v313 = vld [vmem:[%s265 + $0x108] sm:$0xff]
        %v314 = vld [vmem:[%s265 + $0x110] sm:$0xff]
        %v315 = vld [vmem:[%s265 + $0x118] sm:$0xff]
        %v316 = vld [vmem:[%s265 + $0x120] sm:$0xff]
        %v317 = vld [vmem:[%s265 + $0x128] sm:$0xf]
        %v318 = vld [vmem:[%s275] sm:$0xff]
        %v319 = vld [vmem:[%s275 + $0x8] sm:$0xff]
        %v320 = vld [vmem:[%s275 + $0x10] sm:$0xff]
        %v321 = vld [vmem:[%s275 + $0x18] sm:$0xff]
        %v322 = vld [vmem:[%s275 + $0x20] sm:$0xff]
        %v323 = vld [vmem:[%s275 + $0x28] sm:$0xff]
        %v324 = vld [vmem:[%s275 + $0x30] sm:$0xff]
        %v325 = vld [vmem:[%s275 + $0x38] sm:$0xff]
        %v326 = vld [vmem:[%s275 + $0x40] sm:$0xff]
        %v327 = vld [vmem:[%s275 + $0x48] sm:$0xff]
        %v328 = vld [vmem:[%s275 + $0x50] sm:$0xff]
        %v329 = vld [vmem:[%s275 + $0x58] sm:$0xff]
        %v330 = vld [vmem:[%s275 + $0x60] sm:$0xff]
        %v331 = vld [vmem:[%s275 + $0x68] sm:$0xff]
        %v332 = vld [vmem:[%s275 + $0x70] sm:$0xff]
        %v333 = vld [vmem:[%s275 + $0x78] sm:$0xff]
        %v334 = vld [vmem:[%s275 + $0x80] sm:$0xff]
        %v335 = vld [vmem:[%s275 + $0x88] sm:$0xff]
        %v336 = vld [vmem:[%s275 + $0x90] sm:$0xff]
        %v337 = vld [vmem:[%s275 + $0x98] sm:$0xff]
        %v338 = vld [vmem:[%s275 + $0xa0] sm:$0xff]
        %v339 = vld [vmem:[%s275 + $0xa8] sm:$0xff]
        %v340 = vld [vmem:[%s275 + $0xb0] sm:$0xff]
        %v341 = vld [vmem:[%s275 + $0xb8] sm:$0xff]
        %v342 = vld [vmem:[%s275 + $0xc0] sm:$0xff]
        %v343 = vld [vmem:[%s275 + $0xc8] sm:$0xff]
        %v344 = vld [vmem:[%s275 + $0xd0] sm:$0xff]
        %v345 = vld [vmem:[%s275 + $0xd8] sm:$0xff]
        %v346 = vld [vmem:[%s275 + $0xe0] sm:$0xff]
        %v347 = vld [vmem:[%s275 + $0xe8] sm:$0xff]
        %v348 = vld [vmem:[%s275 + $0xf0] sm:$0xff]
        %v349 = vld [vmem:[%s275 + $0xf8] sm:$0xff]
        %v350 = vld [vmem:[%s275 + $0x100] sm:$0xff]
        %v351 = vld [vmem:[%s275 + $0x108] sm:$0xff]
        %v352 = vld [vmem:[%s275 + $0x110] sm:$0xff]
        %v353 = vld [vmem:[%s275 + $0x118] sm:$0xff]
        %v354 = vld [vmem:[%s275 + $0x120] sm:$0xff]
        %v355 = vld [vmem:[%s275 + $0x128] sm:$0xf]
        %v356 = vstv %s279
        %vm357 = vcmask 261120
        %v359 = vsel %vm357, %v278, 0
        %v362 = vsel %vm357, %v280, 0
        %v365 = vsel %vm357, %v281, 0
        %v368 = vsel %vm357, %v282, 0
        %v371 = vsel %vm357, %v283, 0
        %v374 = vsel %vm357, %v284, 0
        %v377 = vsel %vm357, %v285, 0
        %v380 = vsel %vm357, %v286, 0
        %v383 = vsel %vm357, %v287, 0
        %v386 = vsel %vm357, %v288, 0
        %v389 = vsel %vm357, %v289, 0
        %v392 = vsel %vm357, %v290, 0
        %v395 = vsel %vm357, %v291, 0
        %v398 = vsel %vm357, %v292, 0
        %v401 = vsel %vm357, %v293, 0
        %v404 = vsel %vm357, %v294, 0
        %v407 = vsel %vm357, %v295, 0
        %v410 = vsel %vm357, %v296, 0
        %v413 = vsel %vm357, %v297, 0
        %v416 = vsel %vm357, %v298, 0
        %v419 = vsel %vm357, %v299, 0
        %v422 = vsel %vm357, %v300, 0
        %v425 = vsel %vm357, %v301, 0
        %v428 = vsel %vm357, %v302, 0
        %v431 = vsel %vm357, %v303, 0
        %v434 = vsel %vm357, %v304, 0
        %v437 = vsel %vm357, %v305, 0
        %v440 = vsel %vm357, %v306, 0
        %v443 = vsel %vm357, %v307, 0
        %v446 = vsel %vm357, %v308, 0
        %v449 = vsel %vm357, %v309, 0
        %v452 = vsel %vm357, %v310, 0
        %v455 = vsel %vm357, %v311, 0
        %v458 = vsel %vm357, %v312, 0
        %v461 = vsel %vm357, %v313, 0
        %v464 = vsel %vm357, %v314, 0
        %v467 = vsel %vm357, %v315, 0
        %v470 = vsel %vm357, %v316, 0
        %v473 = vsel %vm357, %v317, 0
        %475 = vmatprep.subr.mxu0 0.0
        %476 = vmatpush1.xpose.msra.mxu0 %v362
        %477 = vmatprep.subr.mxu0 0.0
        %478 = vmatpush1.xpose.msra.mxu0 %v365
        %479 = vmatprep.subr.mxu0 0.0
        %480 = vmatpush1.xpose.msra.mxu0 %v368
        %481 = vmatprep.subr.mxu0 0.0
        %482 = vmatpush1.xpose.msra.mxu0 %v371
        %483 = vmatprep.subr.mxu0 0.0
        %484 = vmatpush1.xpose.msra.mxu0 %v374
        %485 = vmatprep.subr.mxu0 0.0
        %486 = vmatpush1.xpose.msra.mxu0 %v377
        %487 = vmatprep.subr.mxu0 0.0
        %488 = vmatpush1.xpose.msra.mxu0 %v380
        %489 = vmatprep.subr.mxu0 0.0
        %490 = vmatpush1.xpose.msra.mxu0 %v383
        %491 = vmatprep.subr.mxu0 0.0
        %492 = vmatpush1.xpose.msra.mxu0 %v386
        %493 = vmatprep.subr.mxu0 0.0
        %494 = vmatpush1.xpose.msra.mxu0 %v389
        %495 = vmatprep.subr.mxu0 0.0
        %496 = vmatpush1.xpose.msra.mxu0 %v392
        %497 = vmatprep.subr.mxu0 0.0
        %498 = vmatpush1.xpose.msra.mxu0 %v395
        %499 = vmatprep.subr.mxu0 0.0
        %500 = vmatpush1.xpose.msra.mxu0 %v398
        %501 = vmatprep.subr.mxu0 0.0
        %502 = vmatpush1.xpose.msra.mxu0 %v401
        %503 = vmatprep.subr.mxu0 0.0
        %504 = vmatpush1.xpose.msra.mxu0 %v404
        %505 = vmatprep.subr.mxu0 0.0
        %506 = vmatpush1.xpose.msra.mxu0 %v407
        %507 = vmatprep.subr.mxu0 0.0
        %508 = vmatpush1.xpose.msra.mxu0 %v410
        %509 = vmatprep.subr.mxu0 0.0
        %510 = vmatpush1.xpose.msra.mxu0 %v413
        %511 = vmatprep.subr.mxu0 0.0
        %512 = vmatpush1.xpose.msra.mxu0 %v416
        %513 = vmatprep.subr.mxu0 0.0
        %514 = vmatpush1.xpose.msra.mxu0 %v419
        %515 = vmatprep.subr.mxu0 0.0
        %516 = vmatpush1.xpose.msra.mxu0 %v422
        %517 = vmatprep.subr.mxu0 0.0
        %518 = vmatpush1.xpose.msra.mxu0 %v425
        %519 = vmatprep.subr.mxu0 0.0
        %520 = vmatpush1.xpose.msra.mxu0 %v428
        %521 = vmatprep.subr.mxu0 0.0
        %522 = vmatpush1.xpose.msra.mxu0 %v431
        %523 = vmatprep.subr.mxu0 0.0
        %524 = vmatpush1.xpose.msra.mxu0 %v434
        %525 = vmatprep.subr.mxu0 0.0
        %526 = vmatpush1.xpose.msra.mxu0 %v437
        %527 = vmatprep.subr.mxu0 0.0
        %528 = vmatpush1.xpose.msra.mxu0 %v440
        %529 = vmatprep.subr.mxu0 0.0
        %530 = vmatpush1.xpose.msra.mxu0 %v443
        %531 = vmatprep.subr.mxu0 0.0
        %532 = vmatpush1.xpose.msra.mxu0 %v446
        %533 = vmatprep.subr.mxu0 0.0
        %534 = vmatpush1.xpose.msra.mxu0 %v449
        %535 = vmatprep.subr.mxu0 0.0
        %536 = vmatpush1.xpose.msra.mxu0 %v452
        %537 = vmatprep.subr.mxu0 0.0
        %538 = vmatpush1.xpose.msra.mxu0 %v455
        %539 = vmatprep.mubr.f32.mxu0 0.0
        %540 = vmatmul.mubr.f32.gmra.mrb[0].mxu0 %v359
        %v541 = vpop.f32.mrb[0].mxu0
        %v542 = vadd.f32 %v356, %v541
        %v543 = vpop.f32.mrb[0].mxu0
        %v544 = vadd.f32 %v356, %v543
        %545 = vdwg.mxu0
        %546 = vmatprep.subr.mxu0 0.0
        %547 = vmatpush1.xpose.msra.mxu0 %v458
        %548 = vmatprep.subr.mxu0 0.0
        %549 = vmatpush1.xpose.msra.mxu0 %v461
        %550 = vmatprep.subr.mxu0 0.0
        %551 = vmatpush1.xpose.msra.mxu0 %v464
        %552 = vmatprep.subr.mxu0 0.0
        %553 = vmatpush1.xpose.msra.mxu0 %v467
        %554 = vmatprep.subr.mxu0 0.0
        %555 = vmatpush1.xpose.msra.mxu0 %v470
        %556 = vmatprep.subr.mxu0 0.0
        %557 = vmatpush1.xpose.msra.mxu0 %v473
        %558 = vmatprep.subr.mxu0 0.0
        %559 = vmatpush1.xpose.msra.mxu0 0.0
        %560 = vmatprep.subr.mxu0 0.0
        %561 = vmatpush1.xpose.msra.mxu0 0.0
        %562 = vmatprep.subr.mxu0 0.0
        %563 = vmatpush1.xpose.msra.mxu0 0.0
        %564 = vmatprep.subr.mxu0 0.0
        %565 = vmatpush1.xpose.msra.mxu0 0.0
        %566 = vmatprep.subr.mxu0 0.0
        %567 = vmatpush1.xpose.msra.mxu0 0.0
        %568 = vmatprep.subr.mxu0 0.0
        %569 = vmatpush1.xpose.msra.mxu0 0.0
        %570 = vmatprep.subr.mxu0 0.0
        %571 = vmatpush1.xpose.msra.mxu0 0.0
        %572 = vmatprep.subr.mxu0 0.0
        %573 = vmatpush1.xpose.msra.mxu0 0.0
        %574 = vmatprep.subr.mxu0 0.0
        %575 = vmatpush1.xpose.msra.mxu0 0.0
        %576 = vmatprep.subr.mxu0 0.0
        %577 = vmatpush1.xpose.msra.mxu0 0.0
        %578 = vmatprep.subr.mxu0 0.0
        %579 = vmatpush1.xpose.msra.mxu0 0.0
        %580 = vmatprep.subr.mxu0 0.0
        %581 = vmatpush1.xpose.msra.mxu0 0.0
        %582 = vmatprep.subr.mxu0 0.0
        %583 = vmatpush1.xpose.msra.mxu0 0.0
        %584 = vmatprep.subr.mxu0 0.0
        %585 = vmatpush1.xpose.msra.mxu0 0.0
        %586 = vmatprep.subr.mxu0 0.0
        %587 = vmatpush1.xpose.msra.mxu0 0.0
        %588 = vmatprep.subr.mxu0 0.0
        %589 = vmatpush1.xpose.msra.mxu0 0.0
        %590 = vmatprep.subr.mxu0 0.0
        %591 = vmatpush1.xpose.msra.mxu0 0.0
        %592 = vmatprep.subr.mxu0 0.0
        %593 = vmatpush1.xpose.msra.mxu0 0.0
        %594 = vmatprep.subr.mxu0 0.0
        %595 = vmatpush1.xpose.msra.mxu0 0.0
        %596 = vmatprep.subr.mxu0 0.0
        %597 = vmatpush1.xpose.msra.mxu0 0.0
        %598 = vmatprep.subr.mxu0 0.0
        %599 = vmatpush1.xpose.msra.mxu0 0.0
        %600 = vmatprep.subr.mxu0 0.0
        %601 = vmatpush1.xpose.msra.mxu0 0.0
        %602 = vmatprep.subr.mxu0 0.0
        %603 = vmatpush1.xpose.msra.mxu0 0.0
        %604 = vmatprep.subr.mxu0 0.0
        %605 = vmatpush1.xpose.msra.mxu0 0.0
        %606 = vmatprep.subr.mxu0 0.0
        %607 = vmatpush1.xpose.msra.mxu0 0.0
        %608 = vmatprep.subr.mxu0 0.0
        %609 = vmatpush1.xpose.msra.mxu0 0.0
        %610 = vmatprep.mubr.f32.mxu0 0.0
        %611 = vmatmul.mubr.f32.gmra.mrb[0].mxu0 %v359
        %v612 = vpop.f32.mrb[0].mxu0
        %v613 = vadd.f32 %v356, %v612
        %v614 = vpop.f32.mrb[0].mxu0
        %615 = vdwg.mxu0
        %v619 = vcombine.low %v542, %v544
        %v621 = vunpack.c.l.s4 1966171168
        %v622 = vunpack.c.0.s8 %v621
        %v623 = vlaneseq
        %v624 = vshrl.u32 %v623, 7
        %v625 = vsub.s32 %v622, %v624
        %v626 = vrot.slane %v619, %v625
        %v628 = vunpack.c.l.s4 1966171168
        %v629 = vunpack.c.0.s8 %v628
        %v630 = vlaneseq
        %v631 = vshrl.u32 %v630, 7
        %v632 = vsub.s32 %v629, %v631
        %v633 = vrot.slane %v613, %v632
        %v634 = vcombine.low %v626, %v633
        %v636 = vunpack.c.l.s4 1966171168
        %v637 = vunpack.c.0.s8 %v636
        %v638 = vlaneseq
        %v639 = vshrl.u32 %v638, 7
        %v640 = vsub.s32 %v637, %v639
        %v641 = vrot.slane %v634, %v640
        %v643 = vlaneseq
        %vm644 = vcmp.ge.s32.totalorder %v643, 0
        %vm645 = vcmp.lt.s32.totalorder %v643, 300
        %vm646 = vmand %vm644, %vm645
        %647 = vst.msk [vmem:[%s253] ss:$2 sm:$0x7] %vm646, %v641
        %v649 = vsel %vm357, %v318, 0
        %v652 = vsel %vm357, %v319, 0
        %v655 = vsel %vm357, %v320, 0
        %v658 = vsel %vm357, %v321, 0
        %v661 = vsel %vm357, %v322, 0
        %v664 = vsel %vm357, %v323, 0
        %v667 = vsel %vm357, %v324, 0
        %v670 = vsel %vm357, %v325, 0
        %v673 = vsel %vm357, %v326, 0
        %v676 = vsel %vm357, %v327, 0
        %v679 = vsel %vm357, %v328, 0
        %v682 = vsel %vm357, %v329, 0
        %v685 = vsel %vm357, %v330, 0
        %v688 = vsel %vm357, %v331, 0
        %v691 = vsel %vm357, %v332, 0
        %v694 = vsel %vm357, %v333, 0
        %v697 = vsel %vm357, %v334, 0
        %v700 = vsel %vm357, %v335, 0
        %v703 = vsel %vm357, %v336, 0
        %v706 = vsel %vm357, %v337, 0
        %v709 = vsel %vm357, %v338, 0
        %v712 = vsel %vm357, %v339, 0
        %v715 = vsel %vm357, %v340, 0
        %v718 = vsel %vm357, %v341, 0
        %v721 = vsel %vm357, %v342, 0
        %v724 = vsel %vm357, %v343, 0
        %v727 = vsel %vm357, %v344, 0
        %v730 = vsel %vm357, %v345, 0
        %v733 = vsel %vm357, %v346, 0
        %v736 = vsel %vm357, %v347, 0
        %v739 = vsel %vm357, %v348, 0
        %v742 = vsel %vm357, %v349, 0
        %v745 = vsel %vm357, %v350, 0
        %v748 = vsel %vm357, %v351, 0
        %v751 = vsel %vm357, %v352, 0
        %v754 = vsel %vm357, %v353, 0
        %v757 = vsel %vm357, %v354, 0
        %v760 = vsel %vm357, %v355, 0
        %762 = vmatprep.subr.mxu0 0.0
        %763 = vmatpush1.xpose.msra.mxu0 %v649
        %764 = vmatprep.subr.mxu0 0.0
        %765 = vmatpush1.xpose.msra.mxu0 %v652
        %766 = vmatprep.subr.mxu0 0.0
        %767 = vmatpush1.xpose.msra.mxu0 %v655
        %768 = vmatprep.subr.mxu0 0.0
        %769 = vmatpush1.xpose.msra.mxu0 %v658
        %770 = vmatprep.subr.mxu0 0.0
        %771 = vmatpush1.xpose.msra.mxu0 %v661
        %772 = vmatprep.subr.mxu0 0.0
        %773 = vmatpush1.xpose.msra.mxu0 %v664
        %774 = vmatprep.subr.mxu0 0.0
        %775 = vmatpush1.xpose.msra.mxu0 %v667
        %776 = vmatprep.subr.mxu0 0.0
        %777 = vmatpush1.xpose.msra.mxu0 %v670
        %778 = vmatprep.subr.mxu0 0.0
        %779 = vmatpush1.xpose.msra.mxu0 %v673
        %780 = vmatprep.subr.mxu0 0.0
        %781 = vmatpush1.xpose.msra.mxu0 %v676
        %782 = vmatprep.subr.mxu0 0.0
        %783 = vmatpush1.xpose.msra.mxu0 %v679
        %784 = vmatprep.subr.mxu0 0.0
        %785 = vmatpush1.xpose.msra.mxu0 %v682
        %786 = vmatprep.subr.mxu0 0.0
        %787 = vmatpush1.xpose.msra.mxu0 %v685
        %788 = vmatprep.subr.mxu0 0.0
        %789 = vmatpush1.xpose.msra.mxu0 %v688
        %790 = vmatprep.subr.mxu0 0.0
        %791 = vmatpush1.xpose.msra.mxu0 %v691
        %792 = vmatprep.subr.mxu0 0.0
        %793 = vmatpush1.xpose.msra.mxu0 %v694
        %794 = vmatprep.subr.mxu0 0.0
        %795 = vmatpush1.xpose.msra.mxu0 %v697
        %796 = vmatprep.subr.mxu0 0.0
        %797 = vmatpush1.xpose.msra.mxu0 %v700
        %798 = vmatprep.subr.mxu0 0.0
        %799 = vmatpush1.xpose.msra.mxu0 %v703
        %800 = vmatprep.subr.mxu0 0.0
        %801 = vmatpush1.xpose.msra.mxu0 %v706
        %802 = vmatprep.subr.mxu0 0.0
        %803 = vmatpush1.xpose.msra.mxu0 %v709
        %804 = vmatprep.subr.mxu0 0.0
        %805 = vmatpush1.xpose.msra.mxu0 %v712
        %806 = vmatprep.subr.mxu0 0.0
        %807 = vmatpush1.xpose.msra.mxu0 %v715
        %808 = vmatprep.subr.mxu0 0.0
        %809 = vmatpush1.xpose.msra.mxu0 %v718
        %810 = vmatprep.subr.mxu0 0.0
        %811 = vmatpush1.xpose.msra.mxu0 %v721
        %812 = vmatprep.subr.mxu0 0.0
        %813 = vmatpush1.xpose.msra.mxu0 %v724
        %814 = vmatprep.subr.mxu0 0.0
        %815 = vmatpush1.xpose.msra.mxu0 %v727
        %816 = vmatprep.subr.mxu0 0.0
        %817 = vmatpush1.xpose.msra.mxu0 %v730
        %818 = vmatprep.subr.mxu0 0.0
        %819 = vmatpush1.xpose.msra.mxu0 %v733
        %820 = vmatprep.subr.mxu0 0.0
        %821 = vmatpush1.xpose.msra.mxu0 %v736
        %822 = vmatprep.subr.mxu0 0.0
        %823 = vmatpush1.xpose.msra.mxu0 %v739
        %824 = vmatprep.subr.mxu0 0.0
        %825 = vmatpush1.xpose.msra.mxu0 %v742
        %826 = vmatprep.mubr.f32.mxu0 0.0
        %827 = vmatmul.mubr.f32.gmra.mrb[0].mxu0 %v359
        %v828 = vpop.f32.mrb[0].mxu0
        %v829 = vadd.f32 %v356, %v828
        %v830 = vpop.f32.mrb[0].mxu0
        %v831 = vadd.f32 %v356, %v830
        %832 = vdwg.mxu0
        %833 = vmatprep.subr.mxu0 0.0
        %834 = vmatpush1.xpose.msra.mxu0 %v745
        %835 = vmatprep.subr.mxu0 0.0
        %836 = vmatpush1.xpose.msra.mxu0 %v748
        %837 = vmatprep.subr.mxu0 0.0
        %838 = vmatpush1.xpose.msra.mxu0 %v751
        %839 = vmatprep.subr.mxu0 0.0
        %840 = vmatpush1.xpose.msra.mxu0 %v754
        %841 = vmatprep.subr.mxu0 0.0
        %842 = vmatpush1.xpose.msra.mxu0 %v757
        %843 = vmatprep.subr.mxu0 0.0
        %844 = vmatpush1.xpose.msra.mxu0 %v760
        %845 = vmatprep.subr.mxu0 0.0
        %846 = vmatpush1.xpose.msra.mxu0 0.0
        %847 = vmatprep.subr.mxu0 0.0
        %848 = vmatpush1.xpose.msra.mxu0 0.0
        %849 = vmatprep.subr.mxu0 0.0
        %850 = vmatpush1.xpose.msra.mxu0 0.0
        %851 = vmatprep.subr.mxu0 0.0
        %852 = vmatpush1.xpose.msra.mxu0 0.0
        %853 = vmatprep.subr.mxu0 0.0
        %854 = vmatpush1.xpose.msra.mxu0 0.0
        %855 = vmatprep.subr.mxu0 0.0
        %856 = vmatpush1.xpose.msra.mxu0 0.0
        %857 = vmatprep.subr.mxu0 0.0
        %858 = vmatpush1.xpose.msra.mxu0 0.0
        %859 = vmatprep.subr.mxu0 0.0
        %860 = vmatpush1.xpose.msra.mxu0 0.0
        %861 = vmatprep.subr.mxu0 0.0
        %862 = vmatpush1.xpose.msra.mxu0 0.0
        %863 = vmatprep.subr.mxu0 0.0
        %864 = vmatpush1.xpose.msra.mxu0 0.0
        %865 = vmatprep.subr.mxu0 0.0
        %866 = vmatpush1.xpose.msra.mxu0 0.0
        %867 = vmatprep.subr.mxu0 0.0
        %868 = vmatpush1.xpose.msra.mxu0 0.0
        %869 = vmatprep.subr.mxu0 0.0
        %870 = vmatpush1.xpose.msra.mxu0 0.0
        %871 = vmatprep.subr.mxu0 0.0
        %872 = vmatpush1.xpose.msra.mxu0 0.0
        %873 = vmatprep.subr.mxu0 0.0
        %874 = vmatpush1.xpose.msra.mxu0 0.0
        %875 = vmatprep.subr.mxu0 0.0
        %876 = vmatpush1.xpose.msra.mxu0 0.0
        %877 = vmatprep.subr.mxu0 0.0
        %878 = vmatpush1.xpose.msra.mxu0 0.0
        %879 = vmatprep.subr.mxu0 0.0
        %880 = vmatpush1.xpose.msra.mxu0 0.0
        %881 = vmatprep.subr.mxu0 0.0
        %882 = vmatpush1.xpose.msra.mxu0 0.0
        %883 = vmatprep.subr.mxu0 0.0
        %884 = vmatpush1.xpose.msra.mxu0 0.0
        %885 = vmatprep.subr.mxu0 0.0
        %886 = vmatpush1.xpose.msra.mxu0 0.0
        %887 = vmatprep.subr.mxu0 0.0
        %888 = vmatpush1.xpose.msra.mxu0 0.0
        %889 = vmatprep.subr.mxu0 0.0
        %890 = vmatpush1.xpose.msra.mxu0 0.0
        %891 = vmatprep.subr.mxu0 0.0
        %892 = vmatpush1.xpose.msra.mxu0 0.0
        %893 = vmatprep.subr.mxu0 0.0
        %894 = vmatpush1.xpose.msra.mxu0 0.0
        %895 = vmatprep.subr.mxu0 0.0
        %896 = vmatpush1.xpose.msra.mxu0 0.0
        %897 = vmatprep.mubr.f32.mxu0 0.0
        %898 = vmatmul.mubr.f32.gmra.mrb[0].mxu0 %v359
        %v899 = vpop.f32.mrb[0].mxu0
        %v900 = vadd.f32 %v356, %v899
        %v901 = vpop.f32.mrb[0].mxu0
        %902 = vdwg.mxu0
        %v906 = vcombine.low %v829, %v831
        %v908 = vunpack.c.l.s4 1966171168
        %v909 = vunpack.c.0.s8 %v908
        %v910 = vlaneseq
        %v911 = vshrl.u32 %v910, 7
        %v912 = vsub.s32 %v909, %v911
        %v913 = vrot.slane %v906, %v912
        %v915 = vunpack.c.l.s4 1966171168
        %v916 = vunpack.c.0.s8 %v915
        %v917 = vlaneseq
        %v918 = vshrl.u32 %v917, 7
        %v919 = vsub.s32 %v916, %v918
        %v920 = vrot.slane %v900, %v919
        %v921 = vcombine.low %v913, %v920
        %v923 = vunpack.c.l.s4 1966171168
        %v924 = vunpack.c.0.s8 %v923
        %v925 = vlaneseq
        %v926 = vshrl.u32 %v925, 7
        %v927 = vsub.s32 %v924, %v926
        %v928 = vrot.slane %v921, %v927
        %s930 = scalar_lea.vmem %s253, 1 [#allocation3]
        %931 = vst.msk [vmem:[%s930] ss:$2 sm:$0x7] %vm646, %v928
        %s932 = sand.u32 %s144, 1
        %s933 = scalar_lea.sflag [#allocation4], %s932
        %s934 = sand.u32 %s144, 1
        %s935 = smul.addr %s934, 6
        %s936 = scalar_lea.vmem [#allocation3], %s935
        // Predicated region
        $region37: #{tpu_custom_call.1} parent=35 // pred_check
          %p937 = pneg %p154
        $region38: #{tpu_custom_call.1} parent=35 // pred_check_branch
          %939 = sbr.rel (%p937) target = $region40
        $region39: #{tpu_custom_call.1} parent=35 // pred_region
          %s940 = smul.u32 3, %s24
          %s942 = ssub.s32 96, 96
          %943 = vsyncadd %s933, %s942
          %s944 = smul.addr %s23, 3
          %s945 = sadd.s32 %s940, %s944
          %s946 = smul.addr %s945, 32
          %s947 = scalar_lea.hbm %s4, %s946
          %s949 = sshll.u32 %s936, 4
          %s950 = int_to_ptr.vmem [resolvable:$true] %s949
          %952 = dma.vmem_to_hbm [thread:$0]  %s950, 96, %s947, %s933
        $region40: #{tpu_custom_call.1} parent=35 // pred_fallthru
          _
      $region36: #{tpu_custom_call.1} parent=5 // pred_fallthru
        _
      %p953 = scmp.le.s32.totalorder 2, %s14
      // Predicated region
      $region41: #{tpu_custom_call.1} parent=5 // pred_check
        %p954 = pneg %p953
      $region42: #{tpu_custom_call.1} parent=5 // pred_check_branch
        %956 = sbr.rel (%p954) target = $region44
      $region43: #{tpu_custom_call.1} parent=5 // pred_region
        %s957 = ssub.s32 %s14, 2
        // Predicated region
        $region45: #{tpu_custom_call.1} parent=43 // pred_check
          %p958 = pneg %p160
        $region46: #{tpu_custom_call.1} parent=43 // pred_check_branch
          %960 = sbr.rel (%p958) target = $region48
        $region47: #{tpu_custom_call.1} parent=43 // pred_region
          %s961 = sand.u32 %s145, 1
          %s962 = scalar_lea.sflag [#allocation4], %s961
          %s963 = sand.u32 %s145, 1
          %s964 = smul.addr %s963, 6
          %s965 = scalar_lea.vmem [#allocation3], %s964
          %966 = dma.done %s962, 96
        $region48: #{tpu_custom_call.1} parent=43 // pred_fallthru
          _
      $region44: #{tpu_custom_call.1} parent=5 // pred_fallthru
        _
    $region6: #{tpu_custom_call.1} parent=1 // loop_footer
      %s18 = sadd.s32 1, %s14
    $region7: #{tpu_custom_call.1} parent=1 // loop_footer_branch
      %13 = sbr.rel target = $region3
    $region8: #{tpu_custom_call.1} parent=1 // loop_exit
      _
    %967 = vsyncpa [#allocation4], 1
    %s968 = scalar_lea.sflag [#allocation4], 1
    %969 = vsyncpa %s968, 1

</llo_original>
